<compile_context>
chip_gen: v7x
topology: tpu7x:2x2x1
jax: 0.10.0
libtpu: 0.0.40
codegen_flags: <defaults>
</compile_context>

<pallas_src>
import jax
import jax.numpy as jnp
from jax.experimental import pallas as pl
from jax.experimental.pallas import tpu as pltpu


def _fused_classifier_kernel(ids_ref, seg_ref, tok_emb_ref, seg_emb_ref,
                             pw_ref, pb_ref, cw_ref, cb_ref, out_ref):
    """Fused embedding gather -> mean-pool -> pooler(tanh) -> Linear+sigmoid.

    ids_ref    : [TB, S, 1] int32  token ids (batch tile)
    seg_ref    : [TB, S, 1] int32  segment ids (batch tile)
    tok_emb_ref: [V, H]     f32    token embedding table (VMEM resident)
    seg_emb_ref: [NSEG, H]  f32    segment embedding table (VMEM resident)
    pw_ref     : [H, H]     bf16   pooler dense weight
    pb_ref     : [1, H]     f32    pooler dense bias
    cw_ref     : [1, H]     f32    classifier weight (row layout)
    cb_ref     : [1]        f32    classifier bias (SMEM scalar)
    out_ref    : [1, TB]    f32    sigmoid probabilities, batch on the lane axis
    """
    tb, s, _ = ids_ref.shape
    v = tok_emb_ref.shape[0]
    nseg = seg_emb_ref.shape[0]

    ids = ids_ref[...]                                            # [TB, S, 1] int32
    segs = seg_ref[...]                                           # [TB, S, 1] int32

    # ---- fused gather + mean-pool -----------------------------------------
    # mean_s emb[ids[b,s]] == (1/S) * counts[b,:] @ emb, counts[b,v] = #{s: ids[b,s]==v}
    vocab_iota = jax.lax.broadcasted_iota(jnp.int32, (tb, s, v), 2)
    tok_counts = jnp.sum((ids == vocab_iota).astype(jnp.float32), axis=1)     # [TB, V]
    tok_pool = jnp.dot(tok_counts, tok_emb_ref[...],
                       preferred_element_type=jnp.float32)                    # [TB, H]

    seg_iota = jax.lax.broadcasted_iota(jnp.int32, (tb, s, nseg), 2)
    seg_counts = jnp.sum((segs == seg_iota).astype(jnp.float32), axis=1)      # [TB, NSEG]
    seg_pool = jnp.zeros_like(tok_pool)
    for k in range(nseg):                       # NSEG == 2: VPU path, no tiny-K matmul
        seg_pool = seg_pool + seg_counts[:, k:k + 1] * seg_emb_ref[k:k + 1, :]

    pooled = (tok_pool + seg_pool) * (1.0 / s)                                # [TB, H]

    # ---- pooler Dense(H,H) + tanh  (bf16 MXU, f32 accumulate) --------------
    h = jnp.dot(pooled.astype(jnp.bfloat16), pw_ref[...],
                preferred_element_type=jnp.float32)
    h = jnp.tanh(h + pb_ref[...])                                             # [TB, H]

    # ---- class_liner: Linear(H,1) + Dropout(eval == identity) + Sigmoid ----
    # N=1 matmul replaced by a VPU multiply + lane reduction.
    logit = jnp.sum(h * cw_ref[...], axis=-1) + cb_ref[0]                     # [TB]
    out_ref[...] = jax.nn.sigmoid(logit)[None, :]                             # [1, TB]


def classifier_model_forward(input_ids, segment_ids, params):
    """Full forward. Returns post-sigmoid probabilities of shape [B] (squeeze(-1))."""
    tok_emb = params["token_emb"].astype(jnp.float32)        # [V, H]
    seg_emb = params["segment_emb"].astype(jnp.float32)      # [NSEG, H]
    B, S = input_ids.shape
    V, H = tok_emb.shape
    NSEG = seg_emb.shape[0]

    pw = params["pooler_w"].astype(jnp.bfloat16)              # bf16 weight -> half the DMA
    pb = params["pooler_b"].reshape(1, H).astype(jnp.float32)
    cw = params["class_w"].reshape(1, H).astype(jnp.float32)  # row layout, no in-kernel T
    cb = params["class_b"].reshape(1).astype(jnp.float32)     # SMEM scalar

    # ids shaped [B, S, 1] so the kernel sees them with S on sublanes (no relayout).
    ids3 = input_ids.astype(jnp.int32).reshape(B, S, 1)
    segs3 = segment_ids.astype(jnp.int32).reshape(B, S, 1)

    # Batch tile: whole batch in one block at small B; 128-wide lane-dense tiles when
    # B allows (keeps the (8,128) tiling rule and the (1, TB) output block legal, and
    # keeps per-block VMEM small enough for v7x's 64 MiB even double-buffered).
    TB = 128 if (B % 128 == 0) else B
    grid = (B // TB,)

    out = pl.pallas_call(
        _fused_classifier_kernel,
        out_shape=jax.ShapeDtypeStruct((1, B), jnp.float32),
        grid=grid,
        in_specs=[
            pl.BlockSpec((TB, S, 1), lambda i: (i, 0, 0)),       # input_ids tile
            pl.BlockSpec((TB, S, 1), lambda i: (i, 0, 0)),       # segment_ids tile
            pl.BlockSpec((V, H), lambda i: (0, 0)),              # token emb (resident)
            pl.BlockSpec((NSEG, H), lambda i: (0, 0)),           # segment emb (resident)
            pl.BlockSpec((H, H), lambda i: (0, 0)),              # pooler W (bf16)
            pl.BlockSpec((1, H), lambda i: (0, 0)),              # pooler b
            pl.BlockSpec((1, H), lambda i: (0, 0)),              # classifier W (row)
            pl.BlockSpec(memory_space=pltpu.MemorySpace.SMEM),   # classifier b (scalar)
        ],
        out_specs=pl.BlockSpec((1, TB), lambda i: (0, i)),       # lane-dense output
        compiler_params=pltpu.CompilerParams(
            dimension_semantics=("parallel",),
            vmem_limit_bytes=32 * 1024 * 1024,
        ),
    )(ids3, segs3, tok_emb, seg_emb, pw, pb, cw, cb)

    return out[0, :]                                             # squeeze(dim=-1) -> [B]


def init_params(key, vocab=64, hidden=32):
    ks = jax.random.split(key, 4)
    scale = 0.02
    return {
        "token_emb": scale * jax.random.normal(ks[0], (vocab, hidden), jnp.float32),
        "segment_emb": scale * jax.random.normal(ks[1], (2, hidden), jnp.float32),
        "pooler_w": scale * jax.random.normal(ks[2], (hidden, hidden), jnp.float32),
        "pooler_b": jnp.zeros((hidden,), jnp.float32),
        "class_w": scale * jax.random.normal(ks[3], (hidden, 1), jnp.float32),
        "class_b": jnp.zeros((1,), jnp.float32),
    }
    # TODO(synk): full transformer baseModel (attention layers) not reproduced; the
    # stand-in embeddings + mean-pool + tanh pooler only honor the pooled-logits contract.
    # TODO(synk): Dropout is eval-mode identity; training would need pltpu.prng_* dropout.
    # TODO(synk): the in-kernel one-hot gather assumes a small vocab table resident in
    # VMEM; a real 30k-vocab BERT embedding needs a scalar-prefetch / DMA row gather.


def _reference_forward(input_ids, segment_ids, params):
    """Pure-JAX f32 reference of the same forward (for correctness check)."""
    emb = params["token_emb"][input_ids] + params["segment_emb"][segment_ids]
    pooled = jnp.mean(emb, axis=1)
    h = jnp.tanh(pooled @ params["pooler_w"] + params["pooler_b"])
    logit = h @ params["class_w"] + params["class_b"]
    return jax.nn.sigmoid(logit)[:, 0]


if __name__ == "__main__":
    key = jax.random.PRNGKey(0)
    k_ids, k_seg, k_params = jax.random.split(key, 3)

    B, S, H, V = 2, 8, 32, 64
    input_ids = jax.random.randint(k_ids, (B, S), 0, V, dtype=jnp.int32)
    segment_ids = jax.random.randint(k_seg, (B, S), 0, 2, dtype=jnp.int32)

    params = init_params(k_params, vocab=V, hidden=H)

    probs = classifier_model_forward(input_ids, segment_ids, params)
    probs = jax.block_until_ready(probs)

    ref = _reference_forward(input_ids, segment_ids, params)

    assert probs.shape == (B,), probs.shape
    assert bool(jnp.all(jnp.isfinite(probs)))
    assert bool(jnp.allclose(probs, ref, atol=2e-3)), (probs, ref)
    print("KERNEL_OK")
</pallas_src>

<mosaic_0001>
module attributes {stable_mosaic.version = 11 : i64} {
  func.func @_fused_classifier_kernel(%arg0: i32, %arg1: memref<2x8x1xi32, #tpu.memory_space<vmem>>, %arg2: memref<2x8x1xi32, #tpu.memory_space<vmem>>, %arg3: memref<64x32xf32, #tpu.memory_space<vmem>>, %arg4: memref<2x32xf32, #tpu.memory_space<vmem>>, %arg5: memref<32x32xbf16, #tpu.memory_space<vmem>>, %arg6: memref<1x32xf32, #tpu.memory_space<vmem>>, %arg7: memref<1x32xf32, #tpu.memory_space<vmem>>, %arg8: memref<1xf32, #tpu.memory_space<smem>>, %arg9: memref<1x2xf32, #tpu.memory_space<vmem>>) attributes {dimension_semantics = [#tpu.dimension_semantics<parallel>], iteration_bounds = array<i64: 1>, scalar_prefetch = 0 : i64, scratch_operands = 0 : i64, tpu.core_type = #tpu.core_type<tc>, window_params = [{transform_indices = @transform_0, window_bounds = array<i64: 2, 8, 1>}, {transform_indices = @transform_1, window_bounds = array<i64: 2, 8, 1>}, {pipeline_mode = #tpu.pipeline_mode<synchronous>, transform_indices = @transform_2, window_bounds = array<i64: 64, 32>}, {pipeline_mode = #tpu.pipeline_mode<synchronous>, transform_indices = @transform_3, window_bounds = array<i64: 2, 32>}, {pipeline_mode = #tpu.pipeline_mode<synchronous>, transform_indices = @transform_4, window_bounds = array<i64: 32, 32>}, {pipeline_mode = #tpu.pipeline_mode<synchronous>, transform_indices = @transform_5, window_bounds = array<i64: 1, 32>}, {pipeline_mode = #tpu.pipeline_mode<synchronous>, transform_indices = @transform_6, window_bounds = array<i64: 1, 32>}, {transform_indices = @transform_7, window_bounds = array<i64: 1>}, {transform_indices = @transform_8, window_bounds = array<i64: 1, 2>}]} {
    %c0 = arith.constant 0 : index
    %c0_0 = arith.constant 0 : index
    %c0_1 = arith.constant 0 : index
    %0 = vector.load %arg1[%c0, %c0_0, %c0_1] : memref<2x8x1xi32, #tpu.memory_space<vmem>>, vector<2x8x1xi32>
    %c0_2 = arith.constant 0 : index
    %c0_3 = arith.constant 0 : index
    %c0_4 = arith.constant 0 : index
    %1 = vector.load %arg2[%c0_2, %c0_3, %c0_4] : memref<2x8x1xi32, #tpu.memory_space<vmem>>, vector<2x8x1xi32>
    %2 = tpu.iota {dimensions = array<i32: 2>} : vector<2x8x64xi32>
    %3 = vector.broadcast %0 : vector<2x8x1xi32> to vector<2x8x64xi32>
    %4 = arith.cmpi eq, %3, %2 : vector<2x8x64xi32>
    %5 = arith.extui %4 : vector<2x8x64xi1> to vector<2x8x64xi32>
    %6 = arith.sitofp %5 : vector<2x8x64xi32> to vector<2x8x64xf32>
    %cst = arith.constant dense<0.000000e+00> : vector<2x64xf32>
    %7 = vector.multi_reduction <add>, %6, %cst [1] : vector<2x8x64xf32> to vector<2x64xf32>
    %c0_5 = arith.constant 0 : index
    %c0_6 = arith.constant 0 : index
    %8 = vector.load %arg3[%c0_5, %c0_6] : memref<64x32xf32, #tpu.memory_space<vmem>>, vector<64x32xf32>
    %cst_7 = arith.constant dense<0.000000e+00> : vector<2x32xf32>
    %9 = tpu.matmul %7, %8, %cst_7 {dimension_numbers = #tpu.dot_dimension_numbers<[1], [0], [0], [1], [0, 0, 1, 1], [], []>} : vector<2x64xf32>, vector<64x32xf32>, vector<2x32xf32> -> vector<2x32xf32>
    %10 = tpu.iota {dimensions = array<i32: 2>} : vector<2x8x2xi32>
    %11 = vector.broadcast %1 : vector<2x8x1xi32> to vector<2x8x2xi32>
    %12 = arith.cmpi eq, %11, %10 : vector<2x8x2xi32>
    %13 = arith.extui %12 : vector<2x8x2xi1> to vector<2x8x2xi32>
    %14 = arith.sitofp %13 : vector<2x8x2xi32> to vector<2x8x2xf32>
    %cst_8 = arith.constant dense<0.000000e+00> : vector<2x2xf32>
    %15 = vector.multi_reduction <add>, %14, %cst_8 [1] : vector<2x8x2xf32> to vector<2x2xf32>
    %cst_9 = arith.constant 0.000000e+00 : f32
    %16 = vector.broadcast %cst_9 : f32 to vector<2x32xf32>
    %17 = vector.extract_strided_slice %15 {offsets = [0, 0], sizes = [2, 1], strides = [1, 1]} : vector<2x2xf32> to vector<2x1xf32>
    %c0_10 = arith.constant 0 : index
    %c0_11 = arith.constant 0 : index
    %18 = vector.load %arg4[%c0_10, %c0_11] : memref<2x32xf32, #tpu.memory_space<vmem>>, vector<1x32xf32>
    %19 = vector.broadcast %17 : vector<2x1xf32> to vector<2x32xf32>
    %20 = vector.broadcast %18 : vector<1x32xf32> to vector<2x32xf32>
    %21 = arith.mulf %19, %20 : vector<2x32xf32>
    %22 = arith.addf %16, %21 : vector<2x32xf32>
    %23 = vector.extract_strided_slice %15 {offsets = [0, 1], sizes = [2, 1], strides = [1, 1]} : vector<2x2xf32> to vector<2x1xf32>
    %c1 = arith.constant 1 : index
    %c0_12 = arith.constant 0 : index
    %24 = vector.load %arg4[%c1, %c0_12] : memref<2x32xf32, #tpu.memory_space<vmem>>, vector<1x32xf32>
    %25 = vector.broadcast %23 : vector<2x1xf32> to vector<2x32xf32>
    %26 = vector.broadcast %24 : vector<1x32xf32> to vector<2x32xf32>
    %27 = arith.mulf %25, %26 : vector<2x32xf32>
    %28 = arith.addf %22, %27 : vector<2x32xf32>
    %29 = arith.addf %9, %28 : vector<2x32xf32>
    %cst_13 = arith.constant 1.250000e-01 : f32
    %30 = vector.broadcast %cst_13 : f32 to vector<2x32xf32>
    %31 = arith.mulf %29, %30 : vector<2x32xf32>
    %32 = arith.truncf %31 : vector<2x32xf32> to vector<2x32xbf16>
    %c0_14 = arith.constant 0 : index
    %c0_15 = arith.constant 0 : index
    %33 = vector.load %arg5[%c0_14, %c0_15] : memref<32x32xbf16, #tpu.memory_space<vmem>>, vector<32x32xbf16>
    %cst_16 = arith.constant dense<0.000000e+00> : vector<2x32xf32>
    %34 = tpu.matmul %32, %33, %cst_16 {dimension_numbers = #tpu.dot_dimension_numbers<[1], [0], [0], [1], [0, 0, 1, 1], [], []>} : vector<2x32xbf16>, vector<32x32xbf16>, vector<2x32xf32> -> vector<2x32xf32>
    %c0_17 = arith.constant 0 : index
    %c0_18 = arith.constant 0 : index
    %35 = vector.load %arg6[%c0_17, %c0_18] : memref<1x32xf32, #tpu.memory_space<vmem>>, vector<1x32xf32>
    %36 = vector.broadcast %35 : vector<1x32xf32> to vector<2x32xf32>
    %37 = arith.addf %34, %36 : vector<2x32xf32>
    %38 = math.tanh %37 : vector<2x32xf32>
    %c0_19 = arith.constant 0 : index
    %c0_20 = arith.constant 0 : index
    %39 = vector.load %arg7[%c0_19, %c0_20] : memref<1x32xf32, #tpu.memory_space<vmem>>, vector<1x32xf32>
    %40 = vector.broadcast %39 : vector<1x32xf32> to vector<2x32xf32>
    %41 = arith.mulf %38, %40 : vector<2x32xf32>
    %cst_21 = arith.constant dense<0.000000e+00> : vector<2xf32>
    %42 = vector.multi_reduction <add>, %41, %cst_21 [1] : vector<2x32xf32> to vector<2xf32>
    %c0_22 = arith.constant 0 : index
    %43 = memref.load %arg8[%c0_22] : memref<1xf32, #tpu.memory_space<smem>>
    %44 = vector.broadcast %43 : f32 to vector<2xf32>
    %45 = arith.addf %42, %44 : vector<2xf32>
    %46 = arith.negf %45 : vector<2xf32>
    %47 = math.exp %46 : vector<2xf32>
    %cst_23 = arith.constant 1.000000e+00 : f32
    %48 = vector.broadcast %cst_23 : f32 to vector<2xf32>
    %49 = arith.addf %48, %47 : vector<2xf32>
    %50 = arith.divf %48, %49 : vector<2xf32>
    %51 = vector.shape_cast %50 : vector<2xf32> to vector<1x2xf32>
    %c0_24 = arith.constant 0 : index
    %c0_25 = arith.constant 0 : index
    %52 = vector.load %arg9[%c0_24, %c0_25] : memref<1x2xf32, #tpu.memory_space<vmem>>, vector<1x2xf32>
    tpu.vector_store %arg9[%c0_24, %c0_25], %51 {strides = array<i32>} : memref<1x2xf32, #tpu.memory_space<vmem>>, vector<1x2xf32>,
    return
  }
  func.func @transform_0(%arg0: i32) -> (i32, i32, i32) {
    %c0_i32 = arith.constant 0 : i32
    %c0_i32_0 = arith.constant 0 : i32
    %c0_i32_1 = arith.constant 0 : i32
    return %arg0, %c0_i32, %c0_i32_0 : i32, i32, i32
  }
  func.func @transform_1(%arg0: i32) -> (i32, i32, i32) {
    %c0_i32 = arith.constant 0 : i32
    %c0_i32_0 = arith.constant 0 : i32
    %c0_i32_1 = arith.constant 0 : i32
    return %arg0, %c0_i32, %c0_i32_0 : i32, i32, i32
  }
  func.func @transform_2(%arg0: i32) -> (i32, i32) {
    %c0_i32 = arith.constant 0 : i32
    %c0_i32_0 = arith.constant 0 : i32
    %c0_i32_1 = arith.constant 0 : i32
    return %c0_i32, %c0_i32_0 : i32, i32
  }
  func.func @transform_3(%arg0: i32) -> (i32, i32) {
    %c0_i32 = arith.constant 0 : i32
    %c0_i32_0 = arith.constant 0 : i32
    %c0_i32_1 = arith.constant 0 : i32
    return %c0_i32, %c0_i32_0 : i32, i32
  }
  func.func @transform_4(%arg0: i32) -> (i32, i32) {
    %c0_i32 = arith.constant 0 : i32
    %c0_i32_0 = arith.constant 0 : i32
    %c0_i32_1 = arith.constant 0 : i32
    return %c0_i32, %c0_i32_0 : i32, i32
  }
  func.func @transform_5(%arg0: i32) -> (i32, i32) {
    %c0_i32 = arith.constant 0 : i32
    %c0_i32_0 = arith.constant 0 : i32
    %c0_i32_1 = arith.constant 0 : i32
    return %c0_i32, %c0_i32_0 : i32, i32
  }
  func.func @transform_6(%arg0: i32) -> (i32, i32) {
    %c0_i32 = arith.constant 0 : i32
    %c0_i32_0 = arith.constant 0 : i32
    %c0_i32_1 = arith.constant 0 : i32
    return %c0_i32, %c0_i32_0 : i32, i32
  }
  func.func @transform_7(%arg0: i32) -> i32 {
    %c0_i32 = arith.constant 0 : i32
    %c0_i32_0 = arith.constant 0 : i32
    return %c0_i32 : i32
  }
  func.func @transform_8(%arg0: i32) -> (i32, i32) {
    %c0_i32 = arith.constant 0 : i32
    %c0_i32_0 = arith.constant 0 : i32
    return %c0_i32, %arg0 : i32, i32
  }
}

</mosaic_0001>

<llo_original>
// kernel: tpu_custom_call.1
$region0: #{tpu_custom_call.1}
  #allocation0 [shape = 'u32[]', space=smem, size = 0x4, offset = 0x4, fixed_abs, tag = 'smem constant byte address 0x4 - core index']
  #allocation1 [shape = 'u32[144,128]{1,0:T(1,128)}', space=vmem, size = 0x12000, scoped, tag = 'internal scratch']
  #allocation2 [shape = 'f32[1]{0:T(128)S(6)}', space=smem, size = 0x200, scoped, tag = 'scoped memory for tpu_custom_call.1']
  %s0 = inlined_call_operand.vmem [shape: s32[2,8,1], index: 0, kind: input, shape index: {}]
  %s1 = inlined_call_operand.vmem [shape: s32[2,8,1], index: 1, kind: input, shape index: {}]
  %s2 = inlined_call_operand.vmem [shape: f32[64,32], index: 2, kind: input, shape index: {}]
  %s3 = inlined_call_operand.vmem [shape: f32[2,32], index: 3, kind: input, shape index: {}]
  %s4 = inlined_call_operand.vmem [shape: bf16[32,32], index: 4, kind: input, shape index: {}]
  %s5 = inlined_call_operand.vmem [shape: f32[1,32], index: 5, kind: input, shape index: {}]
  %s6 = inlined_call_operand.vmem [shape: f32[1,32], index: 6, kind: input, shape index: {}]
  %s7 = inlined_call_operand.<no memory space> [shape: f32[1], index: 7, kind: input, shape index: {}]
  %s8 = inlined_call_operand.hbm [shape: f32[1,2], index: 8, kind: output, shape index: {}]
  %s9 = sld [smem:[#allocation0]]
  $region42: #{tpu_custom_call.1} parent=0
    _
  %s11 = ssub.s32 1, %s9
  %s12 = scalar_select 0, %s11, %s9
  %13 = sst [smem:[#allocation2]] %s7
  $region1: #{tpu_custom_call.1} parent=0
    #allocation3 [shape = 'u8[512]{0}', space=vmem, size = 0x400, scoped, tag = 'output window, operand 0, single buffered']
    #allocation4 [shape = 's32[1]{0}', space=sflag, size = 0x4, scoped, tag = 'scoped memory for tpu_custom_call.1']
    %14 = vsyncpa [#allocation4], 0
    // Predicated region
    $region2: #{tpu_custom_call.1} parent=1 // pred_check
      _
    $region3: #{tpu_custom_call.1} parent=1 // pred_check_branch
      %16 = sbr.rel (0) target = $region5
    $region4: #{tpu_custom_call.1} parent=1 // pred_region
      _
    $region5: #{tpu_custom_call.1} parent=1 // pred_fallthru
      _
    // Predicated region
    $region6: #{tpu_custom_call.1} parent=1 // pred_check
      _
    $region7: #{tpu_custom_call.1} parent=1 // pred_check_branch
      %18 = sbr.rel (0) target = $region9
    $region8: #{tpu_custom_call.1} parent=1 // pred_region
      _
    $region9: #{tpu_custom_call.1} parent=1 // pred_fallthru
      _
    // Predicated region
    $region10: #{tpu_custom_call.1} parent=1 // pred_check
      _
    $region11: #{tpu_custom_call.1} parent=1 // pred_check_branch
      %20 = sbr.rel (0) target = $region13
    $region12: #{tpu_custom_call.1} parent=1 // pred_region
      _
    $region13: #{tpu_custom_call.1} parent=1 // pred_fallthru
      _
    // Predicated region
    $region14: #{tpu_custom_call.1} parent=1 // pred_check
      _
    $region15: #{tpu_custom_call.1} parent=1 // pred_check_branch
      %22 = sbr.rel (0) target = $region17
    $region16: #{tpu_custom_call.1} parent=1 // pred_region
      _
    $region17: #{tpu_custom_call.1} parent=1 // pred_fallthru
      _
    // Predicated region
    $region18: #{tpu_custom_call.1} parent=1 // pred_check
      _
    $region19: #{tpu_custom_call.1} parent=1 // pred_check_branch
      %24 = sbr.rel (0) target = $region21
    $region20: #{tpu_custom_call.1} parent=1 // pred_region
      _
    $region21: #{tpu_custom_call.1} parent=1 // pred_fallthru
      _
    // Predicated region
    $region22: #{tpu_custom_call.1} parent=1 // pred_check
      _
    $region23: #{tpu_custom_call.1} parent=1 // pred_check_branch
      %26 = sbr.rel (0) target = $region25
    $region24: #{tpu_custom_call.1} parent=1 // pred_region
      _
    $region25: #{tpu_custom_call.1} parent=1 // pred_fallthru
      _
    // Predicated region
    $region26: #{tpu_custom_call.1} parent=1 // pred_check
      _
    $region27: #{tpu_custom_call.1} parent=1 // pred_check_branch
      %28 = sbr.rel (0) target = $region29
    $region28: #{tpu_custom_call.1} parent=1 // pred_region
      _
    $region29: #{tpu_custom_call.1} parent=1 // pred_fallthru
      _
    // Predicated region
    $region30: #{tpu_custom_call.1} parent=1 // pred_check
      _
    $region31: #{tpu_custom_call.1} parent=1 // pred_check_branch
      %30 = sbr.rel (0) target = $region33
    $region32: #{tpu_custom_call.1} parent=1 // pred_region
      _
    $region33: #{tpu_custom_call.1} parent=1 // pred_fallthru
      _
    %v32 = vld [vmem:[%s0] sm:$0xff]
    %v33 = vld [vmem:[%s0 + $0x8] sm:$0xff]
    %v34 = vld [vmem:[%s1] sm:$0xff]
    %v35 = vld [vmem:[%s1 + $0x8] sm:$0xff]
    %v36 = vlaneseq
    %v37 = vand.u32 %v36, 127
    %38 = vset.pattern.permute.xlu0 0
    %39 = vperm.xlu0 %38, %v32
    %v40 = vpop.permute.xlu0 %39
    %41 = vset.pattern.permute.xlu0 0
    %42 = vperm.xlu0 %41, %v33
    %v43 = vpop.permute.xlu0 %42
    %vm44 = vcmp.eq.s32.totalorder %v40, %v37
    %vm45 = vcmp.eq.s32.totalorder %v43, %v37
    %v46 = vsel %vm44, 1, 0
    %v47 = vsel %vm45, 1, 0
    %v48 = vcvt.s32.f32 %v46
    %v49 = vcvt.s32.f32 %v47
    %vm50 = vcmask 523264
    %v51 = vsel %vm50, %v48, 0.0
    %v52 = vrot.slane %v51, 4
    %v53 = vadd.f32 %v51, %v52
    %v54 = vrot.slane %v53, 2
    %v55 = vadd.f32 %v53, %v54
    %v56 = vrot.slane %v55, 1
    %v57 = vadd.f32 %v55, %v56
    %v58 = vsel %vm50, %v49, 0.0
    %v59 = vrot.slane %v58, 4
    %v60 = vadd.f32 %v58, %v59
    %v61 = vrot.slane %v60, 2
    %v62 = vadd.f32 %v60, %v61
    %v63 = vrot.slane %v62, 1
    %v64 = vadd.f32 %v62, %v63
    %v65 = vld [vmem:[%s2] sm:$0xff]
    %v66 = vld [vmem:[%s2 + $0x8] sm:$0xff]
    %v67 = vld [vmem:[%s2 + $0x10] sm:$0xff]
    %v68 = vld [vmem:[%s2 + $0x18] sm:$0xff]
    %v69 = vld [vmem:[%s2 + $0x20] sm:$0xff]
    %v70 = vld [vmem:[%s2 + $0x28] sm:$0xff]
    %v71 = vld [vmem:[%s2 + $0x30] sm:$0xff]
    %v72 = vld [vmem:[%s2 + $0x38] sm:$0xff]
    %73 = vset.pattern.permute.xlu0 0
    %74 = vperm.xlu0 %73, %v34
    %v75 = vpop.permute.xlu0 %74
    %76 = vset.pattern.permute.xlu0 0
    %77 = vperm.xlu0 %76, %v35
    %v78 = vpop.permute.xlu0 %77
    %vm79 = vcmp.eq.s32.totalorder %v75, %v37
    %vm80 = vcmp.eq.s32.totalorder %v78, %v37
    %v81 = vsel %vm79, 1, 0
    %v82 = vsel %vm80, 1, 0
    %v83 = vcvt.s32.f32 %v81
    %v84 = vcvt.s32.f32 %v82
    %vm85 = vcmask 15360
    %v86 = vsel %vm85, %v83, 0.0
    %v87 = vrot.slane %v86, 4
    %v88 = vadd.f32 %v86, %v87
    %v89 = vrot.slane %v88, 2
    %v90 = vadd.f32 %v88, %v89
    %v91 = vrot.slane %v90, 1
    %v92 = vadd.f32 %v90, %v91
    %v93 = vsel %vm85, %v84, 0.0
    %v94 = vrot.slane %v93, 4
    %v95 = vadd.f32 %v93, %v94
    %v96 = vrot.slane %v95, 2
    %v97 = vadd.f32 %v95, %v96
    %v98 = vrot.slane %v97, 1
    %v99 = vadd.f32 %v97, %v98
    %v100 = vld [vmem:[%s3] sm:$0x1]
    %102 = vset.pattern.permute.xlu0 0
    %103 = vperm.xlu0 %102, %v92
    %v104 = vpop.permute.xlu0 %103
    %107 = vset.pattern.permute.xlu0 0
    %108 = vperm.xlu0 %107, %v99
    %v109 = vpop.permute.xlu0 %108
    %v111 = vlaneseq
    %v112 = vshrl.u32 %v111, 7
    %v113 = vsub.s32 0, %v112
    %v114 = vrot.slane %v100, %v113
    %v115 = vmul.f32 %v104, %v114
    %v116 = vmul.f32 %v109, %v114
    %v117 = vadd.f32 %v115, 0.0
    %v118 = vadd.f32 %v116, 0.0
    %v119 = vld [vmem:[%s3 + $0x1] sm:$0x1]
    %120 = vset.pattern.permute.xlu0 1
    %121 = vperm.xlu0 %120, %v92
    %v122 = vpop.permute.xlu0 %121
    %124 = vset.pattern.permute.xlu0 1
    %125 = vperm.xlu0 %124, %v99
    %v126 = vpop.permute.xlu0 %125
    %v128 = vlaneseq
    %v129 = vshrl.u32 %v128, 7
    %v130 = vsub.s32 0, %v129
    %v131 = vrot.slane %v119, %v130
    %v132 = vmul.f32 %v122, %v131
    %v133 = vmul.f32 %v126, %v131
    %v134 = vadd.f32 %v117, %v132
    %v135 = vadd.f32 %v118, %v133
    %vm138 = vcmask 1041409
    %v139 = vsel %vm138, %v64, %v57
    %v142 = vrot.slane %v135, 7
    %v143 = vsel %vm138, %v142, %v134
    %v145 = vsel %vm50, %v139, 0
    %147 = vmatprep.subr.mxu0 0.0
    %148 = vmatpush1.msra.mxu0 %v65
    %149 = vmatprep.subr.mxu0 0.0
    %150 = vmatpush1.msra.mxu0 %v66
    %151 = vmatprep.subr.mxu0 0.0
    %152 = vmatpush1.msra.mxu0 %v67
    %153 = vmatprep.subr.mxu0 0.0
    %154 = vmatpush1.msra.mxu0 %v68
    %155 = vmatprep.subr.mxu0 0.0
    %156 = vmatpush1.msra.mxu0 %v69
    %157 = vmatprep.subr.mxu0 0.0
    %158 = vmatpush1.msra.mxu0 %v70
    %159 = vmatprep.subr.mxu0 0.0
    %160 = vmatpush1.msra.mxu0 %v71
    %161 = vmatprep.subr.mxu0 0.0
    %162 = vmatpush1.msra.mxu0 %v72
    %163 = vmatprep.subr.mxu0 0.0
    %164 = vmatpush1.msra.mxu0 0.0
    %165 = vmatprep.subr.mxu0 0.0
    %166 = vmatpush1.msra.mxu0 0.0
    %167 = vmatprep.subr.mxu0 0.0
    %168 = vmatpush1.msra.mxu0 0.0
    %169 = vmatprep.subr.mxu0 0.0
    %170 = vmatpush1.msra.mxu0 0.0
    %171 = vmatprep.subr.mxu0 0.0
    %172 = vmatpush1.msra.mxu0 0.0
    %173 = vmatprep.subr.mxu0 0.0
    %174 = vmatpush1.msra.mxu0 0.0
    %175 = vmatprep.subr.mxu0 0.0
    %176 = vmatpush1.msra.mxu0 0.0
    %177 = vmatprep.subr.mxu0 0.0
    %178 = vmatpush1.msra.mxu0 0.0
    %179 = vmatprep.subr.mxu0 0.0
    %180 = vmatpush1.msra.mxu0 0.0
    %181 = vmatprep.subr.mxu0 0.0
    %182 = vmatpush1.msra.mxu0 0.0
    %183 = vmatprep.subr.mxu0 0.0
    %184 = vmatpush1.msra.mxu0 0.0
    %185 = vmatprep.subr.mxu0 0.0
    %186 = vmatpush1.msra.mxu0 0.0
    %187 = vmatprep.subr.mxu0 0.0
    %188 = vmatpush1.msra.mxu0 0.0
    %189 = vmatprep.subr.mxu0 0.0
    %190 = vmatpush1.msra.mxu0 0.0
    %191 = vmatprep.subr.mxu0 0.0
    %192 = vmatpush1.msra.mxu0 0.0
    %193 = vmatprep.subr.mxu0 0.0
    %194 = vmatpush1.msra.mxu0 0.0
    %195 = vmatprep.subr.mxu0 0.0
    %196 = vmatpush1.msra.mxu0 0.0
    %197 = vmatprep.subr.mxu0 0.0
    %198 = vmatpush1.msra.mxu0 0.0
    %199 = vmatprep.subr.mxu0 0.0
    %200 = vmatpush1.msra.mxu0 0.0
    %201 = vmatprep.subr.mxu0 0.0
    %202 = vmatpush1.msra.mxu0 0.0
    %203 = vmatprep.subr.mxu0 0.0
    %204 = vmatpush1.msra.mxu0 0.0
    %205 = vmatprep.subr.mxu0 0.0
    %206 = vmatpush1.msra.mxu0 0.0
    %207 = vmatprep.subr.mxu0 0.0
    %208 = vmatpush1.msra.mxu0 0.0
    %209 = vmatprep.subr.mxu0 0.0
    %210 = vmatpush1.msra.mxu0 0.0
    %211 = vmatprep.mubr.f32.mxu0 0.0
    %212 = vmatmul.mubr.f32.gmra.mrb[0].mxu0 %v145
    %v213 = vpop.f32.mrb[0].mxu0
    %v214 = vadd.f32 %v143, %v213
    %v215 = vpop.f32.mrb[0].mxu0
    %216 = vdwg.mxu0
    %v217 = vmul.f32 %v214, 0.125
    %v218 = vpack.c.bf16 %v217, %v217
    %v219 = vld [vmem:[%s4] sm:$0xf]
    %v220 = vld [vmem:[%s4 + $0x4] sm:$0xf]
    %v221 = vld [vmem:[%s4 + $0x8] sm:$0xf]
    %v222 = vld [vmem:[%s4 + $0xc] sm:$0xf]
    %v223 = vld [vmem:[%s5] sm:$0x1]
    %v225 = vlaneseq
    %v226 = vshrl.u32 %v225, 7
    %v227 = vsub.s32 0, %v226
    %v228 = vrot.slane %v223, %v227
    %v234 = vunpack.c.l.b16 %v219
    %v235 = vunpack.c.l.b16 %v220
    %v236 = vunpack.c.l.b16 %v221
    %v237 = vunpack.c.l.b16 %v222
    %v238 = vpack.c.b16 %v235, %v234
    %v239 = vpack.c.b16 %v237, %v236
    %vm242 = vcmask 261120
    %v244 = vsel %vm242, %v218, 0
    %246 = vmatprep.subr.bf16.mxu0 0
    %247 = vmatpush1.bf16.msra.mxu0 %v238
    %248 = vmatprep.subr.bf16.mxu0 0
    %249 = vmatpush1.bf16.msra.mxu0 %v239
    %250 = vmatprep.subr.bf16.mxu0 0
    %251 = vmatpush1.bf16.msra.mxu0 0
    %252 = vmatprep.subr.bf16.mxu0 0
    %253 = vmatpush1.bf16.msra.mxu0 0
    %254 = vmatprep.subr.bf16.mxu0 0
    %255 = vmatpush1.bf16.msra.mxu0 0
    %256 = vmatprep.subr.bf16.mxu0 0
    %257 = vmatpush1.bf16.msra.mxu0 0
    %258 = vmatprep.subr.bf16.mxu0 0
    %259 = vmatpush1.bf16.msra.mxu0 0
    %260 = vmatprep.subr.bf16.mxu0 0
    %261 = vmatpush1.bf16.msra.mxu0 0
    %262 = vmatprep.subr.bf16.mxu0 0
    %263 = vmatpush1.bf16.msra.mxu0 0
    %264 = vmatprep.subr.bf16.mxu0 0
    %265 = vmatpush1.bf16.msra.mxu0 0
    %266 = vmatprep.subr.bf16.mxu0 0
    %267 = vmatpush1.bf16.msra.mxu0 0
    %268 = vmatprep.subr.bf16.mxu0 0
    %269 = vmatpush1.bf16.msra.mxu0 0
    %270 = vmatprep.subr.bf16.mxu0 0
    %271 = vmatpush1.bf16.msra.mxu0 0
    %272 = vmatprep.subr.bf16.mxu0 0
    %273 = vmatpush1.bf16.msra.mxu0 0
    %274 = vmatprep.subr.bf16.mxu0 0
    %275 = vmatpush1.bf16.msra.mxu0 0
    %276 = vmatprep.subr.bf16.mxu0 0
    %277 = vmatpush1.bf16.msra.mxu0 0
    %278 = vmatprep.mubr.bf16.mxu0 0
    %279 = vmatmul.mubr.bf16.gmra.mrb[0].mxu0 %v244
    %v280 = vpop.f32.mrb[0].mxu0
    %v281 = vadd.f32 %v228, %v280
    %v282 = vpop.f32.mrb[0].mxu0
    %v283 = vpop.f32.mrb[0].mxu0
    %v284 = vpop.f32.mrb[0].mxu0
    %285 = vdwg.mxu0
    %v286 = vtanh.pop %v281
    %v287 = vld [vmem:[%s6] sm:$0x1]
    %v289 = vlaneseq
    %v290 = vshrl.u32 %v289, 7
    %v291 = vsub.s32 0, %v290
    %v292 = vrot.slane %v287, %v291
    %v294 = vmul.f32 %v286, %v292
    %vm295 = vcmask 254976
    %v296 = vsel %vm295, %v294, 0.0
    %297 = vadd.xlane.f32.xlu0 %v296
    %v298 = vpop.xlane.xlu0 %297
    %s299 = sld [smem:[#allocation2]]
    %v300 = vstv %s299
    %v301 = vadd.f32 %v298, %v300
    %v302 = vxor.u32 %v301, 2147483648
    %v303 = vmul.f32 %v302, 1.442695
    %v304 = vpow.pop %v303
    %v305 = vadd.f32 %v304, 1.0
    %v306 = vrcp.pop %v305
    %v307 = vmul.f32 1.0, %v306
    %v309 = vlaneseq
    %v310 = vshrl.u32 %v309, 7
    %v311 = vsub.s32 %v37, %v310
    %v312 = vrot.slane %v307, %v311
    %vm314 = vcmask 8192
    %315 = vst.msk [vmem:[#allocation3] sm:$0x1] %vm314, %v312
    // Predicated region
    $region34: #{tpu_custom_call.1} parent=1 // pred_check
      _
    $region35: #{tpu_custom_call.1} parent=1 // pred_check_branch
      %317 = sbr.rel (0) target = $region37
    $region36: #{tpu_custom_call.1} parent=1 // pred_region
      %s319 = ssub.s32 16, 16
      %320 = vsyncadd [#allocation4], %s319
      %s322 = sshll.u32 [#allocation3], 4
      %s323 = int_to_ptr.vmem [resolvable:$true] %s322
      %325 = dma.vmem_to_hbm [thread:$0]  %s323, 16, %s8, [#allocation4]
    $region37: #{tpu_custom_call.1} parent=1 // pred_fallthru
      _
    // Predicated region
    $region38: #{tpu_custom_call.1} parent=1 // pred_check
      _
    $region39: #{tpu_custom_call.1} parent=1 // pred_check_branch
      %327 = sbr.rel (0) target = $region41
    $region40: #{tpu_custom_call.1} parent=1 // pred_region
      %328 = dma.done [#allocation4], 16
    $region41: #{tpu_custom_call.1} parent=1 // pred_fallthru
      _
    %329 = vsyncpa [#allocation4], 1

</llo_original>
